<compile_context>
chip_gen: v7x
topology: tpu7x:2x2x1
jax: 0.10.0
libtpu: 0.0.40
codegen_flags: <defaults>
</compile_context>

<pallas_src>
import jax
import jax.numpy as jnp
from jax.experimental import pallas as pl
from jax.experimental.pallas import tpu as pltpu

BN_EPS = 1e-5


def _pick_slab(l, target=1024):
    """Largest multiple of 128 that divides L and is <= target; else full L."""
    cand = [d for d in range(128, min(l, target) + 1, 128) if l % d == 0]
    return max(cand) if cand else l


def _make_coord_att_kernel(h, w, slab, num_slabs):
    def kernel(x_ref, e_ref, w1_ref, b1_ref, ps_ref, wh_ref, bh_ref,
               ww_ref, bw_ref, out_ref):
        # x_ref block: (1, C, L) with L = H*W (lane-dense).
        x = x_ref[0]                                   # (C, L), input dtype

        # Fused coordinate pooling (sum over W and sum over H) as a single NT
        # matmul against the 0/1 indicator matrix E (H+W, L); f32 accumulate.
        sums = jax.lax.dot_general(
            x, e_ref[...], (((1,), (1,)), ((), ())),
            preferred_element_type=jnp.float32)        # (C, H+W)

        # conv1 (1x1, BN + bias pre-folded).  The per-position mean scale
        # (1/W for the H block, 1/H for the W block) commutes with the 1x1
        # conv, so apply it on the small (mip, H+W) matrix.
        y = jnp.dot(w1_ref[...], sums, preferred_element_type=jnp.float32)
        y = y * ps_ref[...] + b1_ref[...]
        # h_swish: y * relu6(y + 3) / 6   (f32 on all chip generations)
        y = y * jnp.clip(y + 3.0, 0.0, 6.0) * (1.0 / 6.0)

        # conv_h / conv_w (1x1) + sigmoid -> per-coordinate attention.
        a_h = jax.nn.sigmoid(
            jnp.dot(wh_ref[...], y[:, :h], preferred_element_type=jnp.float32)
            + bh_ref[...])                             # (oup, H)
        a_w = jax.nn.sigmoid(
            jnp.dot(ww_ref[...], y[:, h:], preferred_element_type=jnp.float32)
            + bw_ref[...])                             # (oup, W)

        def apply_slab(eh_s, ew_s, x_slab_ref, out_slab_ref):
            # gate[c, hh*W + ww] = a_h[c, hh] * a_w[c, ww]  (tiny 0/1 matmuls,
            # stays lane-dense; no cross-lane repeat/tile shuffles).
            gate = (jnp.dot(a_h, eh_s, preferred_element_type=jnp.float32) *
                    jnp.dot(a_w, ew_s, preferred_element_type=jnp.float32))
            xs = x_slab_ref[...]
            out_slab_ref[...] = (xs * gate.astype(xs.dtype)).astype(out_ref.dtype)

        if num_slabs == 1:
            # Small maps: one static, fully lane-aligned pass.
            apply_slab(e_ref[0:h, :].astype(jnp.float32),
                       e_ref[h:h + w, :].astype(jnp.float32),
                       x_ref.at[0], out_ref.at[0])
        else:
            # Chunk the gate expansion + residual multiply over L so the live
            # f32 intermediates stay O(C * slab) instead of O(C * L).
            def slab_body(si, carry):
                start = pl.multiple_of(si * slab, slab)
                eh_s = e_ref[pl.ds(0, h), pl.ds(start, slab)].astype(jnp.float32)
                ew_s = e_ref[pl.ds(h, w), pl.ds(start, slab)].astype(jnp.float32)
                apply_slab(eh_s, ew_s,
                           x_ref.at[0, :, pl.ds(start, slab)],
                           out_ref.at[0, :, pl.ds(start, slab)])
                return carry

            jax.lax.fori_loop(0, num_slabs, slab_body, 0,
                              unroll=num_slabs <= 8)

    return kernel


def coord_att(x, params):
    n, c, h, w = x.shape
    (w1, b1, g, be, mu, var, wh, bh, ww, bw) = params
    oup = wh.shape[0]
    # The final broadcast multiply (identity * a_w * a_h) requires oup == inp.
    assert oup == c, "CoordAtt residual multiply requires oup == inp"

    l = h * w
    slab = _pick_slab(l)
    num_slabs = l // slab

    # Fold BatchNorm (inference) + conv1 bias into the 1x1 conv weights.
    bn_scale = g / jnp.sqrt(var + BN_EPS)                        # (mip, 1)
    w1f = (w1 * bn_scale).astype(jnp.float32)                    # (mip, C)
    b1f = ((b1 - mu) * bn_scale + be).astype(jnp.float32)        # (mip, 1)
    whf, bhf = wh.astype(jnp.float32), bh.astype(jnp.float32)
    wwf, bwf = ww.astype(jnp.float32), bw.astype(jnp.float32)

    # Single fused 0/1 coordinate-indicator matrix (H+W, L), used for both the
    # pooling contraction and the gate expansion (0/1 is exact in any dtype).
    li = jnp.arange(l)
    eh = (li[None, :] // w == jnp.arange(h)[:, None])
    ew = (li[None, :] % w == jnp.arange(w)[:, None])
    e_mat = jnp.concatenate([eh, ew], axis=0).astype(x.dtype)    # (H+W, L)
    pos_scale = jnp.concatenate(
        [jnp.full((h,), 1.0 / w, jnp.float32),
         jnp.full((w,), 1.0 / h, jnp.float32)])[None, :]         # (1, H+W)

    x_flat = x.reshape(n, c, l)

    # Constant index maps -> these blocks are DMA'd only once; default double
    # buffering merely reserves space (pl.Buffered(1) could reclaim it).
    full = lambda a: pl.BlockSpec(a.shape, lambda i, _nd=a.ndim: (0,) * _nd)

    # Generation-aware VMEM budget: in/out blocks double-buffered, E (x2
    # default buffering), small weights, slab intermediates + slack; capped at
    # ~85% of physical VMEM (128 MiB v5e/v6e, 64 MiB v7x).
    try:
        vmem_cap = getattr(pltpu.get_tpu_info(), "vmem_capacity_bytes", None) \
            or (128 << 20)
    except Exception:
        vmem_cap = 128 << 20
    block_bytes = c * l * x.dtype.itemsize
    e_bytes = (h + w) * l * e_mat.dtype.itemsize
    small_bytes = (w1f.size + b1f.size + whf.size + bhf.size + wwf.size
                   + bwf.size + pos_scale.size) * 4
    requested = (4 * block_bytes + 2 * e_bytes + 2 * small_bytes
                 + 3 * c * slab * 4 + (4 << 20))
    vmem_limit = int(min(max(requested, 32 << 20), int(0.85 * vmem_cap)))
    # TODO(synk): for feature maps where 4*C*L*itemsize (+E) exceeds VMEM, add
    # an L-tiling grid axis (phase 0 accumulates pooled sums into scratch,
    # phase 1 applies the gate per L tile) or split into two pallas_calls.
    # TODO(synk): on v7x with N < 2, add a second "parallel" grid axis over L
    # halves so both TensorCores stay busy for single-image inference.

    kernel = _make_coord_att_kernel(h, w, slab, num_slabs)

    out_flat = pl.pallas_call(
        kernel,
        out_shape=jax.ShapeDtypeStruct((n, c, l), x.dtype),
        grid_spec=pltpu.PrefetchScalarGridSpec(
            num_scalar_prefetch=0,
            grid=(n,),
            in_specs=[
                pl.BlockSpec((1, c, l), lambda i: (i, 0, 0)),
                full(e_mat),
                full(w1f), full(b1f), full(pos_scale),
                full(whf), full(bhf), full(wwf), full(bwf),
            ],
            out_specs=pl.BlockSpec((1, c, l), lambda i: (i, 0, 0)),
        ),
        compiler_params=pltpu.CompilerParams(
            dimension_semantics=("parallel",),
            vmem_limit_bytes=vmem_limit),
    )(x_flat, e_mat, w1f, b1f, pos_scale, whf, bhf, wwf, bwf)

    return out_flat.reshape(n, c, h, w)


def make_params(key, inp, oup, reduction=32):
    mip = max(8, inp // reduction)
    ks = jax.random.split(key, 8)
    w1 = jax.random.normal(ks[0], (mip, inp), jnp.float32) * 0.2
    b1 = jax.random.normal(ks[1], (mip, 1), jnp.float32) * 0.1
    gamma = 1.0 + 0.1 * jax.random.normal(ks[2], (mip, 1), jnp.float32)
    beta = 0.1 * jax.random.normal(ks[3], (mip, 1), jnp.float32)
    mean = 0.05 * jax.random.normal(ks[4], (mip, 1), jnp.float32)
    var = 1.0 + 0.1 * jnp.abs(jax.random.normal(ks[5], (mip, 1), jnp.float32))
    wh = jax.random.normal(ks[6], (oup, mip), jnp.float32) * 0.2
    bh = jnp.zeros((oup, 1), jnp.float32)
    ww = jax.random.normal(ks[7], (oup, mip), jnp.float32) * 0.2
    bw = jnp.zeros((oup, 1), jnp.float32)
    return (w1, b1, gamma, beta, mean, var, wh, bh, ww, bw)


def coord_att_ref(x, params):
    """Pure-JAX reference mirroring the PyTorch forward (inference-mode BN)."""
    (w1, b1, g, be, mu, var, wh, bh, ww, bw) = params
    n, c, h, w = x.shape
    x_h = jnp.mean(x, axis=3)                      # (n, c, h)
    x_w = jnp.mean(x, axis=2)                      # (n, c, w)
    y = jnp.concatenate([x_h, x_w], axis=2)        # (n, c, h+w)
    y = jnp.einsum('mc,ncl->nml', w1, y) + b1[None]
    y = (y - mu[None]) / jnp.sqrt(var[None] + BN_EPS) * g[None] + be[None]
    y = y * jnp.clip(y + 3.0, 0.0, 6.0) / 6.0
    yh, yw = y[:, :, :h], y[:, :, h:]
    a_h = jax.nn.sigmoid(jnp.einsum('om,nml->nol', wh, yh) + bh[None])  # (n, oup, h)
    a_w = jax.nn.sigmoid(jnp.einsum('om,nml->nol', ww, yw) + bw[None])  # (n, oup, w)
    return x * a_h[:, :, :, None] * a_w[:, :, None, :]


if __name__ == "__main__":
    key = jax.random.PRNGKey(0)
    kx, kp = jax.random.split(key)

    n, inp, h, w = 2, 4, 16, 16
    oup = inp  # required for the residual broadcast multiply, as in the module's usage
    x = jax.random.normal(kx, (n, inp, h, w), jnp.float32)
    params = make_params(kp, inp, oup)

    out = coord_att(x, params)
    out = jax.block_until_ready(out)

    ref = coord_att_ref(x, params)
    assert out.shape == (n, oup, h, w)
    assert jnp.allclose(out, ref, atol=2e-5, rtol=1e-4), "mismatch vs JAX reference"

    print("KERNEL_OK")
</pallas_src>

<mosaic_0001>
module attributes {stable_mosaic.version = 11 : i64} {
  func.func @kernel(%arg0: i32, %arg1: memref<1x4x256xf32, #tpu.memory_space<vmem>>, %arg2: memref<32x256xf32, #tpu.memory_space<vmem>>, %arg3: memref<8x4xf32, #tpu.memory_space<vmem>>, %arg4: memref<8x1xf32, #tpu.memory_space<vmem>>, %arg5: memref<1x32xf32, #tpu.memory_space<vmem>>, %arg6: memref<4x8xf32, #tpu.memory_space<vmem>>, %arg7: memref<4x1xf32, #tpu.memory_space<vmem>>, %arg8: memref<4x8xf32, #tpu.memory_space<vmem>>, %arg9: memref<4x1xf32, #tpu.memory_space<vmem>>, %arg10: memref<1x4x256xf32, #tpu.memory_space<vmem>>) attributes {dimension_semantics = [#tpu.dimension_semantics<parallel>], iteration_bounds = array<i64: 2>, scalar_prefetch = 0 : i64, scratch_operands = 0 : i64, tpu.core_type = #tpu.core_type<tc>, window_params = [{transform_indices = @transform_0, window_bounds = array<i64: 1, 4, 256>}, {pipeline_mode = #tpu.pipeline_mode<synchronous>, transform_indices = @transform_1, window_bounds = array<i64: 32, 256>}, {pipeline_mode = #tpu.pipeline_mode<synchronous>, transform_indices = @transform_2, window_bounds = array<i64: 8, 4>}, {pipeline_mode = #tpu.pipeline_mode<synchronous>, transform_indices = @transform_3, window_bounds = array<i64: 8, 1>}, {pipeline_mode = #tpu.pipeline_mode<synchronous>, transform_indices = @transform_4, window_bounds = array<i64: 1, 32>}, {pipeline_mode = #tpu.pipeline_mode<synchronous>, transform_indices = @transform_5, window_bounds = array<i64: 4, 8>}, {pipeline_mode = #tpu.pipeline_mode<synchronous>, transform_indices = @transform_6, window_bounds = array<i64: 4, 1>}, {pipeline_mode = #tpu.pipeline_mode<synchronous>, transform_indices = @transform_7, window_bounds = array<i64: 4, 8>}, {pipeline_mode = #tpu.pipeline_mode<synchronous>, transform_indices = @transform_8, window_bounds = array<i64: 4, 1>}, {transform_indices = @transform_9, window_bounds = array<i64: 1, 4, 256>}]} {
    %c0 = arith.constant 0 : index
    %c0_0 = arith.constant 0 : index
    %c0_1 = arith.constant 0 : index
    %0 = vector.load %arg1[%c0, %c0_0, %c0_1] : memref<1x4x256xf32, #tpu.memory_space<vmem>>, vector<1x4x256xf32>
    %1 = vector.shape_cast %0 : vector<1x4x256xf32> to vector<4x256xf32>
    %c0_2 = arith.constant 0 : index
    %c0_3 = arith.constant 0 : index
    %2 = vector.load %arg2[%c0_2, %c0_3] : memref<32x256xf32, #tpu.memory_space<vmem>>, vector<32x256xf32>
    %cst = arith.constant dense<0.000000e+00> : vector<4x32xf32>
    %3 = tpu.matmul %1, %2, %cst {dimension_numbers = #tpu.dot_dimension_numbers<[1], [1], [0], [0], [0, 0, 1, 0], [], []>} : vector<4x256xf32>, vector<32x256xf32>, vector<4x32xf32> -> vector<4x32xf32>
    %c0_4 = arith.constant 0 : index
    %c0_5 = arith.constant 0 : index
    %4 = vector.load %arg3[%c0_4, %c0_5] : memref<8x4xf32, #tpu.memory_space<vmem>>, vector<8x4xf32>
    %cst_6 = arith.constant dense<0.000000e+00> : vector<8x32xf32>
    %5 = tpu.matmul %4, %3, %cst_6 {dimension_numbers = #tpu.dot_dimension_numbers<[1], [0], [0], [1], [0, 0, 1, 1], [], []>} : vector<8x4xf32>, vector<4x32xf32>, vector<8x32xf32> -> vector<8x32xf32>
    %c0_7 = arith.constant 0 : index
    %c0_8 = arith.constant 0 : index
    %6 = vector.load %arg5[%c0_7, %c0_8] : memref<1x32xf32, #tpu.memory_space<vmem>>, vector<1x32xf32>
    %7 = vector.broadcast %6 : vector<1x32xf32> to vector<8x32xf32>
    %8 = arith.mulf %5, %7 : vector<8x32xf32>
    %c0_9 = arith.constant 0 : index
    %c0_10 = arith.constant 0 : index
    %9 = vector.load %arg4[%c0_9, %c0_10] : memref<8x1xf32, #tpu.memory_space<vmem>>, vector<8x1xf32>
    %10 = vector.broadcast %9 : vector<8x1xf32> to vector<8x32xf32>
    %11 = arith.addf %8, %10 : vector<8x32xf32>
    %cst_11 = arith.constant 3.000000e+00 : f32
    %12 = vector.broadcast %cst_11 : f32 to vector<8x32xf32>
    %13 = arith.addf %11, %12 : vector<8x32xf32>
    %cst_12 = arith.constant 0.000000e+00 : f32
    %cst_13 = arith.constant 6.000000e+00 : f32
    %14 = vector.broadcast %cst_12 : f32 to vector<8x32xf32>
    %15 = arith.maximumf %14, %13 : vector<8x32xf32>
    %16 = vector.broadcast %cst_13 : f32 to vector<8x32xf32>
    %17 = arith.minimumf %16, %15 : vector<8x32xf32>
    %18 = arith.mulf %11, %17 : vector<8x32xf32>
    %cst_14 = arith.constant 0.166666672 : f32
    %19 = vector.broadcast %cst_14 : f32 to vector<8x32xf32>
    %20 = arith.mulf %18, %19 : vector<8x32xf32>
    %c0_15 = arith.constant 0 : index
    %c0_16 = arith.constant 0 : index
    %21 = vector.load %arg6[%c0_15, %c0_16] : memref<4x8xf32, #tpu.memory_space<vmem>>, vector<4x8xf32>
    %22 = vector.extract_strided_slice %20 {offsets = [0, 0], sizes = [8, 16], strides = [1, 1]} : vector<8x32xf32> to vector<8x16xf32>
    %cst_17 = arith.constant dense<0.000000e+00> : vector<4x16xf32>
    %23 = tpu.matmul %21, %22, %cst_17 {dimension_numbers = #tpu.dot_dimension_numbers<[1], [0], [0], [1], [0, 0, 1, 1], [], []>} : vector<4x8xf32>, vector<8x16xf32>, vector<4x16xf32> -> vector<4x16xf32>
    %c0_18 = arith.constant 0 : index
    %c0_19 = arith.constant 0 : index
    %24 = vector.load %arg7[%c0_18, %c0_19] : memref<4x1xf32, #tpu.memory_space<vmem>>, vector<4x1xf32>
    %25 = vector.broadcast %24 : vector<4x1xf32> to vector<4x16xf32>
    %26 = arith.addf %23, %25 : vector<4x16xf32>
    %27 = arith.negf %26 : vector<4x16xf32>
    %28 = math.exp %27 : vector<4x16xf32>
    %cst_20 = arith.constant 1.000000e+00 : f32
    %29 = vector.broadcast %cst_20 : f32 to vector<4x16xf32>
    %30 = arith.addf %29, %28 : vector<4x16xf32>
    %31 = arith.divf %29, %30 : vector<4x16xf32>
    %c0_21 = arith.constant 0 : index
    %c0_22 = arith.constant 0 : index
    %32 = vector.load %arg8[%c0_21, %c0_22] : memref<4x8xf32, #tpu.memory_space<vmem>>, vector<4x8xf32>
    %33 = vector.extract_strided_slice %20 {offsets = [0, 16], sizes = [8, 16], strides = [1, 1]} : vector<8x32xf32> to vector<8x16xf32>
    %cst_23 = arith.constant dense<0.000000e+00> : vector<4x16xf32>
    %34 = tpu.matmul %32, %33, %cst_23 {dimension_numbers = #tpu.dot_dimension_numbers<[1], [0], [0], [1], [0, 0, 1, 1], [], []>} : vector<4x8xf32>, vector<8x16xf32>, vector<4x16xf32> -> vector<4x16xf32>
    %c0_24 = arith.constant 0 : index
    %c0_25 = arith.constant 0 : index
    %35 = vector.load %arg9[%c0_24, %c0_25] : memref<4x1xf32, #tpu.memory_space<vmem>>, vector<4x1xf32>
    %36 = vector.broadcast %35 : vector<4x1xf32> to vector<4x16xf32>
    %37 = arith.addf %34, %36 : vector<4x16xf32>
    %38 = arith.negf %37 : vector<4x16xf32>
    %39 = math.exp %38 : vector<4x16xf32>
    %cst_26 = arith.constant 1.000000e+00 : f32
    %40 = vector.broadcast %cst_26 : f32 to vector<4x16xf32>
    %41 = arith.addf %40, %39 : vector<4x16xf32>
    %42 = arith.divf %40, %41 : vector<4x16xf32>
    %c0_27 = arith.constant 0 : index
    %c0_28 = arith.constant 0 : index
    %43 = vector.load %arg2[%c0_27, %c0_28] : memref<32x256xf32, #tpu.memory_space<vmem>>, vector<16x256xf32>
    %c16 = arith.constant 16 : index
    %c0_29 = arith.constant 0 : index
    %44 = vector.load %arg2[%c16, %c0_29] : memref<32x256xf32, #tpu.memory_space<vmem>>, vector<16x256xf32>
    %cst_30 = arith.constant dense<0.000000e+00> : vector<4x256xf32>
    %45 = tpu.matmul %31, %43, %cst_30 {dimension_numbers = #tpu.dot_dimension_numbers<[1], [0], [0], [1], [0, 0, 1, 1], [], []>} : vector<4x16xf32>, vector<16x256xf32>, vector<4x256xf32> -> vector<4x256xf32>
    %cst_31 = arith.constant dense<0.000000e+00> : vector<4x256xf32>
    %46 = tpu.matmul %42, %44, %cst_31 {dimension_numbers = #tpu.dot_dimension_numbers<[1], [0], [0], [1], [0, 0, 1, 1], [], []>} : vector<4x16xf32>, vector<16x256xf32>, vector<4x256xf32> -> vector<4x256xf32>
    %47 = arith.mulf %45, %46 : vector<4x256xf32>
    %c0_32 = arith.constant 0 : index
    %c0_33 = arith.constant 0 : index
    %c0_34 = arith.constant 0 : index
    %48 = vector.load %arg1[%c0_32, %c0_33, %c0_34] : memref<1x4x256xf32, #tpu.memory_space<vmem>>, vector<1x4x256xf32>
    %49 = vector.shape_cast %48 : vector<1x4x256xf32> to vector<4x256xf32>
    %50 = arith.mulf %49, %47 : vector<4x256xf32>
    %c0_35 = arith.constant 0 : index
    %c0_36 = arith.constant 0 : index
    %c0_37 = arith.constant 0 : index
    %51 = vector.load %arg10[%c0_35, %c0_36, %c0_37] : memref<1x4x256xf32, #tpu.memory_space<vmem>>, vector<1x4x256xf32>
    %52 = vector.shape_cast %51 : vector<1x4x256xf32> to vector<4x256xf32>
    %53 = vector.shape_cast %50 : vector<4x256xf32> to vector<1x4x256xf32>
    tpu.vector_store %arg10[%c0_35, %c0_36, %c0_37], %53 {strides = array<i32>} : memref<1x4x256xf32, #tpu.memory_space<vmem>>, vector<1x4x256xf32>,
    return
  }
  func.func @transform_0(%arg0: i32) -> (i32, i32, i32) {
    %c0_i32 = arith.constant 0 : i32
    %c0_i32_0 = arith.constant 0 : i32
    %c0_i32_1 = arith.constant 0 : i32
    return %arg0, %c0_i32, %c0_i32_0 : i32, i32, i32
  }
  func.func @transform_1(%arg0: i32) -> (i32, i32) {
    %c0_i32 = arith.constant 0 : i32
    %c0_i32_0 = arith.constant 0 : i32
    %c0_i32_1 = arith.constant 0 : i32
    return %c0_i32, %c0_i32_0 : i32, i32
  }
  func.func @transform_2(%arg0: i32) -> (i32, i32) {
    %c0_i32 = arith.constant 0 : i32
    %c0_i32_0 = arith.constant 0 : i32
    %c0_i32_1 = arith.constant 0 : i32
    return %c0_i32, %c0_i32_0 : i32, i32
  }
  func.func @transform_3(%arg0: i32) -> (i32, i32) {
    %c0_i32 = arith.constant 0 : i32
    %c0_i32_0 = arith.constant 0 : i32
    %c0_i32_1 = arith.constant 0 : i32
    return %c0_i32, %c0_i32_0 : i32, i32
  }
  func.func @transform_4(%arg0: i32) -> (i32, i32) {
    %c0_i32 = arith.constant 0 : i32
    %c0_i32_0 = arith.constant 0 : i32
    %c0_i32_1 = arith.constant 0 : i32
    return %c0_i32, %c0_i32_0 : i32, i32
  }
  func.func @transform_5(%arg0: i32) -> (i32, i32) {
    %c0_i32 = arith.constant 0 : i32
    %c0_i32_0 = arith.constant 0 : i32
    %c0_i32_1 = arith.constant 0 : i32
    return %c0_i32, %c0_i32_0 : i32, i32
  }
  func.func @transform_6(%arg0: i32) -> (i32, i32) {
    %c0_i32 = arith.constant 0 : i32
    %c0_i32_0 = arith.constant 0 : i32
    %c0_i32_1 = arith.constant 0 : i32
    return %c0_i32, %c0_i32_0 : i32, i32
  }
  func.func @transform_7(%arg0: i32) -> (i32, i32) {
    %c0_i32 = arith.constant 0 : i32
    %c0_i32_0 = arith.constant 0 : i32
    %c0_i32_1 = arith.constant 0 : i32
    return %c0_i32, %c0_i32_0 : i32, i32
  }
  func.func @transform_8(%arg0: i32) -> (i32, i32) {
    %c0_i32 = arith.constant 0 : i32
    %c0_i32_0 = arith.constant 0 : i32
    %c0_i32_1 = arith.constant 0 : i32
    return %c0_i32, %c0_i32_0 : i32, i32
  }
  func.func @transform_9(%arg0: i32) -> (i32, i32, i32) {
    %c0_i32 = arith.constant 0 : i32
    %c0_i32_0 = arith.constant 0 : i32
    %c0_i32_1 = arith.constant 0 : i32
    return %arg0, %c0_i32, %c0_i32_0 : i32, i32, i32
  }
}

</mosaic_0001>

<llo_original>
// kernel: tpu_custom_call.1
$region0: #{tpu_custom_call.1}
  #allocation0 [shape = 'u32[]', space=smem, size = 0x4, offset = 0x4, fixed_abs, tag = 'smem constant byte address 0x4 - core index']
  #allocation1 [shape = 'u32[144,128]{1,0:T(1,128)}', space=vmem, size = 0x12000, scoped, tag = 'internal scratch']
  %s0 = inlined_call_operand.vmem [shape: f32[2,4,256], index: 0, kind: input, shape index: {}]
  %s1 = inlined_call_operand.hbm [shape: f32[32,256], index: 1, kind: input, shape index: {}]
  %s2 = inlined_call_operand.vmem [shape: f32[8,4], index: 2, kind: input, shape index: {}]
  %s3 = inlined_call_operand.vmem [shape: f32[8,1], index: 3, kind: input, shape index: {}]
  %s4 = inlined_call_operand.vmem [shape: f32[1,32], index: 4, kind: input, shape index: {}]
  %s5 = inlined_call_operand.vmem [shape: f32[4,8], index: 5, kind: input, shape index: {}]
  %s6 = inlined_call_operand.vmem [shape: f32[4,1], index: 6, kind: input, shape index: {}]
  %s7 = inlined_call_operand.vmem [shape: f32[4,8], index: 7, kind: input, shape index: {}]
  %s8 = inlined_call_operand.vmem [shape: f32[4,1], index: 8, kind: input, shape index: {}]
  %s9 = inlined_call_operand.hbm [shape: f32[2,4,256], index: 9, kind: output, shape index: {}]
  %s10 = sld [smem:[#allocation0]]
  $region73: #{tpu_custom_call.1} parent=0
    _
  %s12 = ssub.s32 1, %s10
  %s13 = scalar_select 0, %s12, %s10
  $region1: #{tpu_custom_call.1} parent=0
    #allocation2 [shape = 'u8[32768]{0}', space=vmem, size = 0x8000, scoped, tag = 'input window, operand 1, single buffered']
    #allocation3 [shape = 's32[2]{0}', space=sflag, size = 0x8, scoped, tag = 'scoped memory for tpu_custom_call.1']
    #allocation4 [shape = 's32[2]{0}', space=sflag, size = 0x8, scoped, tag = 'scoped memory for tpu_custom_call.1']
    #allocation5 [shape = 'u8[8192]{0}', space=vmem, size = 0x2000, scoped, tag = 'output window, operand 0']
    %14 = vsyncpa [#allocation3], 0
    %15 = vsyncpa [#allocation4], 0
    %s16 = scalar_lea.sflag [#allocation4], 1
    %17 = vsyncpa %s16, 0
    loop: start=0, step=1, limit=4
    $region2: #{tpu_custom_call.1} parent=1 // loop_pre_header
      _
    $region3: #{tpu_custom_call.1} parent=1 // loop_header
      %s19 = sphi 0, %s23
      %p20 = scmp.ge.s32.totalorder %s19, 4
      %s29 = sphi 0, %s31
      %s32 = sphi 0, %s29
      %s33 = sphi 0, %s32
      %s49 = sphi 0, %s33
      %s53 = sphi 0, %s53
      %s55 = sphi 0, %s53
      %s56 = sphi 0, %s55
      %s70 = sphi 0, %s56
      %s74 = sphi 0, %s74
      %s76 = sphi 0, %s74
      %s77 = sphi 0, %s76
      %s91 = sphi 0, %s77
      %s95 = sphi 0, %s95
      %s97 = sphi 0, %s95
      %s98 = sphi 0, %s97
      %s112 = sphi 0, %s98
      %s116 = sphi 0, %s116
      %s118 = sphi 0, %s116
      %s119 = sphi 0, %s118
      %s133 = sphi 0, %s119
      %s137 = sphi 0, %s137
      %s139 = sphi 0, %s137
      %s140 = sphi 0, %s139
      %s154 = sphi 0, %s140
      %s158 = sphi 0, %s158
      %s160 = sphi 0, %s158
      %s161 = sphi 0, %s160
      %s175 = sphi 0, %s161
      %s179 = sphi 0, %s179
      %s181 = sphi 0, %s179
      %s182 = sphi 0, %s181
      %s196 = sphi 0, %s182
      %s200 = sphi 0, %s200
      %s202 = sphi 0, %s200
      %s203 = sphi 0, %s202
      %s217 = sphi 0, %s203
      %s223 = sphi 0, %s225
      %s226 = sphi 0, %s223
      %s227 = sphi 0, %s226
      %s243 = sphi 0, %s227
    $region4: #{tpu_custom_call.1} parent=1 // loop_header_branch
      %22 = sbr.rel (%p20) target = $region8
    $region5: #{tpu_custom_call.1} parent=1 // loop_body
      %s24 = ssub.s32 %s19, 1
      %s25 = ssub.s32 %s19, 2
      %s26 = sadd.s32 %s19, 1
      %s27 = ssub.s32 %s19, %s26
      %p28 = scmp.eq.s32.totalorder %s27, 0
      %s30 = sadd.s32 %s29, 1
      %s31 = scalar_select %p28, %s29, %s30
      %p34 = pneg %p28
      %p35 = scmp.eq.s32.totalorder %s19, 1
      %p36 = por %p34, %p35
      %p37 = scmp.ne.s32.totalorder %s29, %s32
      %p38 = scmp.eq.s32.totalorder %s19, 0
      %p39 = por %p37, %p38
      %p40 = scmp.ne.s32.totalorder %s29, %s32
      %p41 = scmp.eq.s32.totalorder %s24, 1
      %p42 = por %p40, %p41
      %p43 = scmp.ne.s32.totalorder %s32, %s33
      %p44 = scmp.eq.s32.totalorder %s24, 0
      %p45 = por %p43, %p44
      %p46 = scmp.ne.s32.totalorder %s32, %s33
      %p47 = scmp.eq.s32.totalorder %s25, 1
      %p48 = por %p46, %p47
      %p50 = scmp.ne.s32.totalorder %s33, %s49
      %p51 = scmp.eq.s32.totalorder %s25, 0
      %p52 = por %p50, %p51
      %s54 = sadd.s32 %s53, 1
      %p57 = scmp.eq.s32.totalorder %s19, 1
      %p58 = scmp.ne.s32.totalorder %s53, %s55
      %p59 = scmp.eq.s32.totalorder %s19, 0
      %p60 = por %p58, %p59
      %p61 = scmp.ne.s32.totalorder %s53, %s55
      %p62 = scmp.eq.s32.totalorder %s24, 1
      %p63 = por %p61, %p62
      %p64 = scmp.ne.s32.totalorder %s55, %s56
      %p65 = scmp.eq.s32.totalorder %s24, 0
      %p66 = por %p64, %p65
      %p67 = scmp.ne.s32.totalorder %s55, %s56
      %p68 = scmp.eq.s32.totalorder %s25, 1
      %p69 = por %p67, %p68
      %p71 = scmp.ne.s32.totalorder %s56, %s70
      %p72 = scmp.eq.s32.totalorder %s25, 0
      %p73 = por %p71, %p72
      %s75 = sadd.s32 %s74, 1
      %p78 = scmp.eq.s32.totalorder %s19, 1
      %p79 = scmp.ne.s32.totalorder %s74, %s76
      %p80 = scmp.eq.s32.totalorder %s19, 0
      %p81 = por %p79, %p80
      %p82 = scmp.ne.s32.totalorder %s74, %s76
      %p83 = scmp.eq.s32.totalorder %s24, 1
      %p84 = por %p82, %p83
      %p85 = scmp.ne.s32.totalorder %s76, %s77
      %p86 = scmp.eq.s32.totalorder %s24, 0
      %p87 = por %p85, %p86
      %p88 = scmp.ne.s32.totalorder %s76, %s77
      %p89 = scmp.eq.s32.totalorder %s25, 1
      %p90 = por %p88, %p89
      %p92 = scmp.ne.s32.totalorder %s77, %s91
      %p93 = scmp.eq.s32.totalorder %s25, 0
      %p94 = por %p92, %p93
      %s96 = sadd.s32 %s95, 1
      %p99 = scmp.eq.s32.totalorder %s19, 1
      %p100 = scmp.ne.s32.totalorder %s95, %s97
      %p101 = scmp.eq.s32.totalorder %s19, 0
      %p102 = por %p100, %p101
      %p103 = scmp.ne.s32.totalorder %s95, %s97
      %p104 = scmp.eq.s32.totalorder %s24, 1
      %p105 = por %p103, %p104
      %p106 = scmp.ne.s32.totalorder %s97, %s98
      %p107 = scmp.eq.s32.totalorder %s24, 0
      %p108 = por %p106, %p107
      %p109 = scmp.ne.s32.totalorder %s97, %s98
      %p110 = scmp.eq.s32.totalorder %s25, 1
      %p111 = por %p109, %p110
      %p113 = scmp.ne.s32.totalorder %s98, %s112
      %p114 = scmp.eq.s32.totalorder %s25, 0
      %p115 = por %p113, %p114
      %s117 = sadd.s32 %s116, 1
      %p120 = scmp.eq.s32.totalorder %s19, 1
      %p121 = scmp.ne.s32.totalorder %s116, %s118
      %p122 = scmp.eq.s32.totalorder %s19, 0
      %p123 = por %p121, %p122
      %p124 = scmp.ne.s32.totalorder %s116, %s118
      %p125 = scmp.eq.s32.totalorder %s24, 1
      %p126 = por %p124, %p125
      %p127 = scmp.ne.s32.totalorder %s118, %s119
      %p128 = scmp.eq.s32.totalorder %s24, 0
      %p129 = por %p127, %p128
      %p130 = scmp.ne.s32.totalorder %s118, %s119
      %p131 = scmp.eq.s32.totalorder %s25, 1
      %p132 = por %p130, %p131
      %p134 = scmp.ne.s32.totalorder %s119, %s133
      %p135 = scmp.eq.s32.totalorder %s25, 0
      %p136 = por %p134, %p135
      %s138 = sadd.s32 %s137, 1
      %p141 = scmp.eq.s32.totalorder %s19, 1
      %p142 = scmp.ne.s32.totalorder %s137, %s139
      %p143 = scmp.eq.s32.totalorder %s19, 0
      %p144 = por %p142, %p143
      %p145 = scmp.ne.s32.totalorder %s137, %s139
      %p146 = scmp.eq.s32.totalorder %s24, 1
      %p147 = por %p145, %p146
      %p148 = scmp.ne.s32.totalorder %s139, %s140
      %p149 = scmp.eq.s32.totalorder %s24, 0
      %p150 = por %p148, %p149
      %p151 = scmp.ne.s32.totalorder %s139, %s140
      %p152 = scmp.eq.s32.totalorder %s25, 1
      %p153 = por %p151, %p152
      %p155 = scmp.ne.s32.totalorder %s140, %s154
      %p156 = scmp.eq.s32.totalorder %s25, 0
      %p157 = por %p155, %p156
      %s159 = sadd.s32 %s158, 1
      %p162 = scmp.eq.s32.totalorder %s19, 1
      %p163 = scmp.ne.s32.totalorder %s158, %s160
      %p164 = scmp.eq.s32.totalorder %s19, 0
      %p165 = por %p163, %p164
      %p166 = scmp.ne.s32.totalorder %s158, %s160
      %p167 = scmp.eq.s32.totalorder %s24, 1
      %p168 = por %p166, %p167
      %p169 = scmp.ne.s32.totalorder %s160, %s161
      %p170 = scmp.eq.s32.totalorder %s24, 0
      %p171 = por %p169, %p170
      %p172 = scmp.ne.s32.totalorder %s160, %s161
      %p173 = scmp.eq.s32.totalorder %s25, 1
      %p174 = por %p172, %p173
      %p176 = scmp.ne.s32.totalorder %s161, %s175
      %p177 = scmp.eq.s32.totalorder %s25, 0
      %p178 = por %p176, %p177
      %s180 = sadd.s32 %s179, 1
      %p183 = scmp.eq.s32.totalorder %s19, 1
      %p184 = scmp.ne.s32.totalorder %s179, %s181
      %p185 = scmp.eq.s32.totalorder %s19, 0
      %p186 = por %p184, %p185
      %p187 = scmp.ne.s32.totalorder %s179, %s181
      %p188 = scmp.eq.s32.totalorder %s24, 1
      %p189 = por %p187, %p188
      %p190 = scmp.ne.s32.totalorder %s181, %s182
      %p191 = scmp.eq.s32.totalorder %s24, 0
      %p192 = por %p190, %p191
      %p193 = scmp.ne.s32.totalorder %s181, %s182
      %p194 = scmp.eq.s32.totalorder %s25, 1
      %p195 = por %p193, %p194
      %p197 = scmp.ne.s32.totalorder %s182, %s196
      %p198 = scmp.eq.s32.totalorder %s25, 0
      %p199 = por %p197, %p198
      %s201 = sadd.s32 %s200, 1
      %p204 = scmp.eq.s32.totalorder %s19, 1
      %p205 = scmp.ne.s32.totalorder %s200, %s202
      %p206 = scmp.eq.s32.totalorder %s19, 0
      %p207 = por %p205, %p206
      %p208 = scmp.ne.s32.totalorder %s200, %s202
      %p209 = scmp.eq.s32.totalorder %s24, 1
      %p210 = por %p208, %p209
      %p211 = scmp.ne.s32.totalorder %s202, %s203
      %p212 = scmp.eq.s32.totalorder %s24, 0
      %p213 = por %p211, %p212
      %p214 = scmp.ne.s32.totalorder %s202, %s203
      %p215 = scmp.eq.s32.totalorder %s25, 1
      %p216 = por %p214, %p215
      %p218 = scmp.ne.s32.totalorder %s203, %s217
      %p219 = scmp.eq.s32.totalorder %s25, 0
      %p220 = por %p218, %p219
      %s221 = ssub.s32 %s19, %s26
      %p222 = scmp.eq.s32.totalorder %s221, 0
      %s224 = sadd.s32 %s223, 1
      %s225 = scalar_select %p222, %s223, %s224
      %p228 = pneg %p222
      %p229 = scmp.eq.s32.totalorder %s19, 1
      %p230 = por %p228, %p229
      %p231 = scmp.ne.s32.totalorder %s223, %s226
      %p232 = scmp.eq.s32.totalorder %s19, 0
      %p233 = por %p231, %p232
      %p234 = scmp.ne.s32.totalorder %s223, %s226
      %p235 = scmp.eq.s32.totalorder %s24, 1
      %p236 = por %p234, %p235
      %p237 = scmp.ne.s32.totalorder %s226, %s227
      %p238 = scmp.eq.s32.totalorder %s24, 0
      %p239 = por %p237, %p238
      %p240 = scmp.ne.s32.totalorder %s226, %s227
      %p241 = scmp.eq.s32.totalorder %s25, 1
      %p242 = por %p240, %p241
      %p244 = scmp.ne.s32.totalorder %s227, %s243
      %p245 = scmp.eq.s32.totalorder %s25, 0
      %p246 = por %p244, %p245
      %p247 = scmp.le.s32.totalorder 1, %s19
      %p248 = scmp.lt.s32.totalorder %s19, 3
      %p249 = pnand %p247, %p248
      %p250 = pneg %p249
      // Predicated region
      $region9: #{tpu_custom_call.1} parent=5 // pred_check
        _
      $region10: #{tpu_custom_call.1} parent=5 // pred_check_branch
        %252 = sbr.rel (%p249) target = $region12
      $region11: #{tpu_custom_call.1} parent=5 // pred_region
        %s253 = ssub.s32 %s19, 1
        // Predicated region
        $region13: #{tpu_custom_call.1} parent=11 // pred_check
          %p254 = pneg %p66
        $region14: #{tpu_custom_call.1} parent=11 // pred_check_branch
          %256 = sbr.rel (%p254) target = $region16
        $region15: #{tpu_custom_call.1} parent=11 // pred_region
          %s258 = ssub.s32 1024, 1024
          %259 = vsyncadd [#allocation3], %s258
          %s260 = sshll.u32 [#allocation2], 4
          %s261 = int_to_ptr.vmem [resolvable:$true] %s260
          %266 = dma.hbm_to_vmem [thread:$0]  %s1, 1024, %s261, [#allocation3], 256, 256, 16
        $region16: #{tpu_custom_call.1} parent=11 // pred_fallthru
          _
        // Predicated region
        $region17: #{tpu_custom_call.1} parent=11 // pred_check
          %p267 = pneg %p87
        $region18: #{tpu_custom_call.1} parent=11 // pred_check_branch
          %269 = sbr.rel (%p267) target = $region20
        $region19: #{tpu_custom_call.1} parent=11 // pred_region
          _
        $region20: #{tpu_custom_call.1} parent=11 // pred_fallthru
          _
        // Predicated region
        $region21: #{tpu_custom_call.1} parent=11 // pred_check
          %p270 = pneg %p108
        $region22: #{tpu_custom_call.1} parent=11 // pred_check_branch
          %272 = sbr.rel (%p270) target = $region24
        $region23: #{tpu_custom_call.1} parent=11 // pred_region
          _
        $region24: #{tpu_custom_call.1} parent=11 // pred_fallthru
          _
        // Predicated region
        $region25: #{tpu_custom_call.1} parent=11 // pred_check
          %p273 = pneg %p129
        $region26: #{tpu_custom_call.1} parent=11 // pred_check_branch
          %275 = sbr.rel (%p273) target = $region28
        $region27: #{tpu_custom_call.1} parent=11 // pred_region
          _
        $region28: #{tpu_custom_call.1} parent=11 // pred_fallthru
          _
        // Predicated region
        $region29: #{tpu_custom_call.1} parent=11 // pred_check
          %p276 = pneg %p150
        $region30: #{tpu_custom_call.1} parent=11 // pred_check_branch
          %278 = sbr.rel (%p276) target = $region32
        $region31: #{tpu_custom_call.1} parent=11 // pred_region
          _
        $region32: #{tpu_custom_call.1} parent=11 // pred_fallthru
          _
        // Predicated region
        $region33: #{tpu_custom_call.1} parent=11 // pred_check
          %p279 = pneg %p171
        $region34: #{tpu_custom_call.1} parent=11 // pred_check_branch
          %281 = sbr.rel (%p279) target = $region36
        $region35: #{tpu_custom_call.1} parent=11 // pred_region
          _
        $region36: #{tpu_custom_call.1} parent=11 // pred_fallthru
          _
        // Predicated region
        $region37: #{tpu_custom_call.1} parent=11 // pred_check
          %p282 = pneg %p192
        $region38: #{tpu_custom_call.1} parent=11 // pred_check_branch
          %284 = sbr.rel (%p282) target = $region40
        $region39: #{tpu_custom_call.1} parent=11 // pred_region
          _
        $region40: #{tpu_custom_call.1} parent=11 // pred_fallthru
          _
        // Predicated region
        $region41: #{tpu_custom_call.1} parent=11 // pred_check
          %p285 = pneg %p213
        $region42: #{tpu_custom_call.1} parent=11 // pred_check_branch
          %287 = sbr.rel (%p285) target = $region44
        $region43: #{tpu_custom_call.1} parent=11 // pred_region
          _
        $region44: #{tpu_custom_call.1} parent=11 // pred_fallthru
          _
      $region12: #{tpu_custom_call.1} parent=5 // pred_fallthru
        _
      %p288 = scmp.lt.s32.totalorder %s19, 2
      // Predicated region
      $region45: #{tpu_custom_call.1} parent=5 // pred_check
        %p289 = pneg %p288
      $region46: #{tpu_custom_call.1} parent=5 // pred_check_branch
        %291 = sbr.rel (%p289) target = $region48
      $region47: #{tpu_custom_call.1} parent=5 // pred_region
        // Predicated region
        $region49: #{tpu_custom_call.1} parent=47 // pred_check
          %p292 = pneg %p39
        $region50: #{tpu_custom_call.1} parent=47 // pred_check_branch
          %294 = sbr.rel (%p292) target = $region52
        $region51: #{tpu_custom_call.1} parent=47 // pred_region
          %p295 = scmp.lt.s32.totalorder %s19, 1
          %s296 = scalar_select %p295, %s19, 1
          %s297 = smul.addr %s296, 2
          %s298 = smul.addr %s297, 4
          %s299 = scalar_lea.vmem %s0, %s298
        $region52: #{tpu_custom_call.1} parent=47 // pred_fallthru
          _
      $region48: #{tpu_custom_call.1} parent=5 // pred_fallthru
        _
      %p300 = scmp.le.s32.totalorder 1, %s19
      %p301 = scmp.lt.s32.totalorder %s19, 3
      %p302 = pnand %p300, %p301
      %p303 = pneg %p302
      // Predicated region
      $region53: #{tpu_custom_call.1} parent=5 // pred_check
        _
      $region54: #{tpu_custom_call.1} parent=5 // pred_check_branch
        %305 = sbr.rel (%p302) target = $region56
      $region55: #{tpu_custom_call.1} parent=5 // pred_region
        %s306 = ssub.s32 %s19, 1
        // Predicated region
        $region57: #{tpu_custom_call.1} parent=55 // pred_check
          %p307 = pneg %p66
        $region58: #{tpu_custom_call.1} parent=55 // pred_check_branch
          %309 = sbr.rel (%p307) target = $region60
        $region59: #{tpu_custom_call.1} parent=55 // pred_region
          %310 = dma.done [#allocation3], 1024
        $region60: #{tpu_custom_call.1} parent=55 // pred_fallthru
          _
        %p311 = scmp.lt.s32.totalorder %s24, 1
        %s312 = scalar_select %p311, %s24, 1
        %s313 = smul.addr %s312, 2
        %s314 = smul.addr %s313, 4
        %s315 = scalar_lea.vmem %s0, %s314
        %p316 = pneg %p45
        %p317 = pneg %p42
        %p318 = pneg %p66
        %p319 = pneg %p63
        %p320 = pneg %p87
        %p321 = pneg %p84
        %p322 = pneg %p108
        %p323 = pneg %p105
        %p324 = pneg %p129
        %p325 = pneg %p126
        %p326 = pneg %p150
        %p327 = pneg %p147
        %p328 = pneg %p171
        %p329 = pneg %p168
        %p330 = pneg %p192
        %p331 = pneg %p189
        %p332 = pneg %p213
        %p333 = pneg %p210
        %p334 = pneg %p239
        %p335 = pneg %p236
        %s336 = sand.u32 %s226, 1
        %s337 = scalar_lea.sflag [#allocation4], %s336
        %s338 = sand.u32 %s226, 1
        %s339 = smul.addr %s338, 8
        %s340 = scalar_lea.vmem [#allocation5], %s339
        %p341 = scmp.lt.s32.totalorder %s24, 1
        %s342 = scalar_select %p341, %s24, 1
        %s343 = smul.addr %s342, 2
        %s344 = smul.addr %s343, 4
        %s345 = scalar_lea.vmem %s0, %s344
        %v346 = vld [vmem:[%s345] sm:$0xff]
        %v347 = vld [vmem:[#allocation2] sm:$0xff]
        %v348 = vld [vmem:[#allocation2 + $0x8] sm:$0xff]
        %v349 = vld [vmem:[#allocation2 + $0x10] sm:$0xff]
        %v350 = vld [vmem:[#allocation2 + $0x18] sm:$0xff]
        %v351 = vld [vmem:[#allocation2 + $0x20] sm:$0xff]
        %v352 = vld [vmem:[#allocation2 + $0x28] sm:$0xff]
        %v353 = vld [vmem:[#allocation2 + $0x30] sm:$0xff]
        %v354 = vld [vmem:[#allocation2 + $0x38] sm:$0xff]
        %v356 = vcombine.high %v346, %v346
        %358 = vmatprep.subr.mxu0 %v348
        %359 = vmatpush1.xpose.msra.mxu0 %v347
        %360 = vmatprep.subr.mxu0 %v350
        %361 = vmatpush1.xpose.msra.mxu0 %v349
        %362 = vmatprep.subr.mxu0 %v352
        %363 = vmatpush1.xpose.msra.mxu0 %v351
        %364 = vmatprep.subr.mxu0 %v354
        %365 = vmatpush1.xpose.msra.mxu0 %v353
        %366 = vmatprep.subr.mxu0 0.0
        %367 = vmatpush1.xpose.msra.mxu0 0.0
        %368 = vmatprep.subr.mxu0 0.0
        %369 = vmatpush1.xpose.msra.mxu0 0.0
        %370 = vmatprep.subr.mxu0 0.0
        %371 = vmatpush1.xpose.msra.mxu0 0.0
        %372 = vmatprep.subr.mxu0 0.0
        %373 = vmatpush1.xpose.msra.mxu0 0.0
        %374 = vmatprep.subr.mxu0 0.0
        %375 = vmatpush1.xpose.msra.mxu0 0.0
        %376 = vmatprep.subr.mxu0 0.0
        %377 = vmatpush1.xpose.msra.mxu0 0.0
        %378 = vmatprep.subr.mxu0 0.0
        %379 = vmatpush1.xpose.msra.mxu0 0.0
        %380 = vmatprep.subr.mxu0 0.0
        %381 = vmatpush1.xpose.msra.mxu0 0.0
        %382 = vmatprep.subr.mxu0 0.0
        %383 = vmatpush1.xpose.msra.mxu0 0.0
        %384 = vmatprep.subr.mxu0 0.0
        %385 = vmatpush1.xpose.msra.mxu0 0.0
        %386 = vmatprep.subr.mxu0 0.0
        %387 = vmatpush1.xpose.msra.mxu0 0.0
        %388 = vmatprep.subr.mxu0 0.0
        %389 = vmatpush1.xpose.msra.mxu0 0.0
        %390 = vmatprep.subr.mxu0 0.0
        %391 = vmatpush1.xpose.msra.mxu0 0.0
        %392 = vmatprep.subr.mxu0 0.0
        %393 = vmatpush1.xpose.msra.mxu0 0.0
        %394 = vmatprep.subr.mxu0 0.0
        %395 = vmatpush1.xpose.msra.mxu0 0.0
        %396 = vmatprep.subr.mxu0 0.0
        %397 = vmatpush1.xpose.msra.mxu0 0.0
        %398 = vmatprep.subr.mxu0 0.0
        %399 = vmatpush1.xpose.msra.mxu0 0.0
        %400 = vmatprep.subr.mxu0 0.0
        %401 = vmatpush1.xpose.msra.mxu0 0.0
        %402 = vmatprep.subr.mxu0 0.0
        %403 = vmatpush1.xpose.msra.mxu0 0.0
        %404 = vmatprep.subr.mxu0 0.0
        %405 = vmatpush1.xpose.msra.mxu0 0.0
        %406 = vmatprep.subr.mxu0 0.0
        %407 = vmatpush1.xpose.msra.mxu0 0.0
        %408 = vmatprep.subr.mxu0 0.0
        %409 = vmatpush1.xpose.msra.mxu0 0.0
        %410 = vmatprep.subr.mxu0 0.0
        %411 = vmatpush1.xpose.msra.mxu0 0.0
        %412 = vmatprep.subr.mxu0 0.0
        %413 = vmatpush1.xpose.msra.mxu0 0.0
        %414 = vmatprep.subr.mxu0 0.0
        %415 = vmatpush1.xpose.msra.mxu0 0.0
        %416 = vmatprep.subr.mxu0 0.0
        %417 = vmatpush1.xpose.msra.mxu0 0.0
        %418 = vmatprep.subr.mxu0 0.0
        %419 = vmatpush1.xpose.msra.mxu0 0.0
        %420 = vmatprep.subr.mxu0 0.0
        %421 = vmatpush1.xpose.msra.mxu0 0.0
        %422 = vmatprep.mubr.f32.mxu0 %v356
        %423 = vmatmul.mubr.f32.gmra.mrb[0].mxu0 %v346
        %v424 = vpop.f32.mrb[0].mxu0
        %v425 = vadd.f32 0.0, %v424
        %v426 = vpop.f32.mrb[0].mxu0
        %427 = vdwg.mxu0
        %v428 = vld [vmem:[%s2] sm:$0xff]
        %vm429 = vcmask 31744
        %v431 = vsel %vm429, %v428, 0
        %vm433 = vcmask 1043456
        %v435 = vsel %vm433, %v425, 0
        %437 = vmatprep.subr.mxu0 0.0
        %438 = vmatpush1.msra.mxu0 %v435
        %439 = vmatprep.subr.mxu0 0.0
        %440 = vmatpush1.msra.mxu0 0.0
        %441 = vmatprep.subr.mxu0 0.0
        %442 = vmatpush1.msra.mxu0 0.0
        %443 = vmatprep.subr.mxu0 0.0
        %444 = vmatpush1.msra.mxu0 0.0
        %445 = vmatprep.subr.mxu0 0.0
        %446 = vmatpush1.msra.mxu0 0.0
        %447 = vmatprep.subr.mxu0 0.0
        %448 = vmatpush1.msra.mxu0 0.0
        %449 = vmatprep.subr.mxu0 0.0
        %450 = vmatpush1.msra.mxu0 0.0
        %451 = vmatprep.subr.mxu0 0.0
        %452 = vmatpush1.msra.mxu0 0.0
        %453 = vmatprep.subr.mxu0 0.0
        %454 = vmatpush1.msra.mxu0 0.0
        %455 = vmatprep.subr.mxu0 0.0
        %456 = vmatpush1.msra.mxu0 0.0
        %457 = vmatprep.subr.mxu0 0.0
        %458 = vmatpush1.msra.mxu0 0.0
        %459 = vmatprep.subr.mxu0 0.0
        %460 = vmatpush1.msra.mxu0 0.0
        %461 = vmatprep.subr.mxu0 0.0
        %462 = vmatpush1.msra.mxu0 0.0
        %463 = vmatprep.subr.mxu0 0.0
        %464 = vmatpush1.msra.mxu0 0.0
        %465 = vmatprep.subr.mxu0 0.0
        %466 = vmatpush1.msra.mxu0 0.0
        %467 = vmatprep.subr.mxu0 0.0
        %468 = vmatpush1.msra.mxu0 0.0
        %469 = vmatprep.subr.mxu0 0.0
        %470 = vmatpush1.msra.mxu0 0.0
        %471 = vmatprep.subr.mxu0 0.0
        %472 = vmatpush1.msra.mxu0 0.0
        %473 = vmatprep.subr.mxu0 0.0
        %474 = vmatpush1.msra.mxu0 0.0
        %475 = vmatprep.subr.mxu0 0.0
        %476 = vmatpush1.msra.mxu0 0.0
        %477 = vmatprep.subr.mxu0 0.0
        %478 = vmatpush1.msra.mxu0 0.0
        %479 = vmatprep.subr.mxu0 0.0
        %480 = vmatpush1.msra.mxu0 0.0
        %481 = vmatprep.subr.mxu0 0.0
        %482 = vmatpush1.msra.mxu0 0.0
        %483 = vmatprep.subr.mxu0 0.0
        %484 = vmatpush1.msra.mxu0 0.0
        %485 = vmatprep.subr.mxu0 0.0
        %486 = vmatpush1.msra.mxu0 0.0
        %487 = vmatprep.subr.mxu0 0.0
        %488 = vmatpush1.msra.mxu0 0.0
        %489 = vmatprep.subr.mxu0 0.0
        %490 = vmatpush1.msra.mxu0 0.0
        %491 = vmatprep.subr.mxu0 0.0
        %492 = vmatpush1.msra.mxu0 0.0
        %493 = vmatprep.subr.mxu0 0.0
        %494 = vmatpush1.msra.mxu0 0.0
        %495 = vmatprep.subr.mxu0 0.0
        %496 = vmatpush1.msra.mxu0 0.0
        %497 = vmatprep.subr.mxu0 0.0
        %498 = vmatpush1.msra.mxu0 0.0
        %499 = vmatprep.subr.mxu0 0.0
        %500 = vmatpush1.msra.mxu0 0.0
        %501 = vmatprep.mubr.f32.mxu0 0.0
        %502 = vmatmul.mubr.f32.gmra.mrb[0].mxu0 %v431
        %v503 = vpop.f32.mrb[0].mxu0
        %v504 = vadd.f32 0.0, %v503
        %v505 = vpop.f32.mrb[0].mxu0
        %506 = vdwg.mxu0
        %v507 = vld [vmem:[%s4] sm:$0x1]
        %v509 = vlaneseq
        %v510 = vshrl.u32 %v509, 7
        %v511 = vsub.s32 0, %v510
        %v512 = vrot.slane %v507, %v511
        %v514 = vmul.f32 %v504, %v512
        %v515 = vld [vmem:[%s3] sm:$0xff]
        %517 = vset.pattern.permute.xlu0 0
        %518 = vperm.xlu0 %517, %v515
        %v519 = vpop.permute.xlu0 %518
        %v521 = vadd.f32 %v514, %v519
        %v522 = vadd.f32 %v521, 3.0
        %v523 = vmax.f32 %v522, 0.0
        %v524 = vmin.f32 %v523, 6.0
        %v525 = vmul.f32 %v521, %v524
        %v526 = vmul.f32 %v525, 0.16666667
        %v527 = vld [vmem:[%s5] sm:$0xf]
        %v528 = vld [vmem:[%s6] sm:$0xf]
        %530 = vset.pattern.permute.xlu0 0
        %531 = vperm.xlu0 %530, %v528
        %v532 = vpop.permute.xlu0 %531
        %vm534 = vcmask 64512
        %v536 = vsel %vm534, %v527, 0
        %538 = vmatprep.subr.mxu0 0.0
        %539 = vmatpush1.msra.mxu0 %v526
        %540 = vmatprep.subr.mxu0 0.0
        %541 = vmatpush1.msra.mxu0 0.0
        %542 = vmatprep.subr.mxu0 0.0
        %543 = vmatpush1.msra.mxu0 0.0
        %544 = vmatprep.subr.mxu0 0.0
        %545 = vmatpush1.msra.mxu0 0.0
        %546 = vmatprep.subr.mxu0 0.0
        %547 = vmatpush1.msra.mxu0 0.0
        %548 = vmatprep.subr.mxu0 0.0
        %549 = vmatpush1.msra.mxu0 0.0
        %550 = vmatprep.subr.mxu0 0.0
        %551 = vmatpush1.msra.mxu0 0.0
        %552 = vmatprep.subr.mxu0 0.0
        %553 = vmatpush1.msra.mxu0 0.0
        %554 = vmatprep.subr.mxu0 0.0
        %555 = vmatpush1.msra.mxu0 0.0
        %556 = vmatprep.subr.mxu0 0.0
        %557 = vmatpush1.msra.mxu0 0.0
        %558 = vmatprep.subr.mxu0 0.0
        %559 = vmatpush1.msra.mxu0 0.0
        %560 = vmatprep.subr.mxu0 0.0
        %561 = vmatpush1.msra.mxu0 0.0
        %562 = vmatprep.subr.mxu0 0.0
        %563 = vmatpush1.msra.mxu0 0.0
        %564 = vmatprep.subr.mxu0 0.0
        %565 = vmatpush1.msra.mxu0 0.0
        %566 = vmatprep.subr.mxu0 0.0
        %567 = vmatpush1.msra.mxu0 0.0
        %568 = vmatprep.subr.mxu0 0.0
        %569 = vmatpush1.msra.mxu0 0.0
        %570 = vmatprep.subr.mxu0 0.0
        %571 = vmatpush1.msra.mxu0 0.0
        %572 = vmatprep.subr.mxu0 0.0
        %573 = vmatpush1.msra.mxu0 0.0
        %574 = vmatprep.subr.mxu0 0.0
        %575 = vmatpush1.msra.mxu0 0.0
        %576 = vmatprep.subr.mxu0 0.0
        %577 = vmatpush1.msra.mxu0 0.0
        %578 = vmatprep.subr.mxu0 0.0
        %579 = vmatpush1.msra.mxu0 0.0
        %580 = vmatprep.subr.mxu0 0.0
        %581 = vmatpush1.msra.mxu0 0.0
        %582 = vmatprep.subr.mxu0 0.0
        %583 = vmatpush1.msra.mxu0 0.0
        %584 = vmatprep.subr.mxu0 0.0
        %585 = vmatpush1.msra.mxu0 0.0
        %586 = vmatprep.subr.mxu0 0.0
        %587 = vmatpush1.msra.mxu0 0.0
        %588 = vmatprep.subr.mxu0 0.0
        %589 = vmatpush1.msra.mxu0 0.0
        %590 = vmatprep.subr.mxu0 0.0
        %591 = vmatpush1.msra.mxu0 0.0
        %592 = vmatprep.subr.mxu0 0.0
        %593 = vmatpush1.msra.mxu0 0.0
        %594 = vmatprep.subr.mxu0 0.0
        %595 = vmatpush1.msra.mxu0 0.0
        %596 = vmatprep.subr.mxu0 0.0
        %597 = vmatpush1.msra.mxu0 0.0
        %598 = vmatprep.subr.mxu0 0.0
        %599 = vmatpush1.msra.mxu0 0.0
        %600 = vmatprep.subr.mxu0 0.0
        %601 = vmatpush1.msra.mxu0 0.0
        %602 = vmatprep.mubr.f32.mxu0 0.0
        %603 = vmatmul.mubr.f32.gmra.mrb[0].mxu0 %v536
        %v604 = vpop.f32.mrb[0].mxu0
        %v605 = vadd.f32 %v532, %v604
        %v606 = vpop.f32.mrb[0].mxu0
        %607 = vdwg.mxu0
        %v608 = vxor.u32 %v605, 2147483648
        %v609 = vmul.f32 %v608, 1.442695
        %v610 = vpow.pop %v609
        %v611 = vadd.f32 %v610, 1.0
        %v612 = vrcp.pop %v611
        %v613 = vmul.f32 1.0, %v612
        %v614 = vld [vmem:[%s7] sm:$0xf]
        %v615 = vld [vmem:[%s8] sm:$0xf]
        %617 = vset.pattern.permute.xlu0 0
        %618 = vperm.xlu0 %617, %v615
        %v619 = vpop.permute.xlu0 %618
        %622 = vrot.lane.b32.xlu0 %v526, 112
        %v623 = vpop.permute.xlu0 %622
        %v626 = vsel %vm534, %v614, 0
        %628 = vmatprep.subr.mxu0 0.0
        %629 = vmatpush1.msra.mxu0 %v623
        %630 = vmatprep.subr.mxu0 0.0
        %631 = vmatpush1.msra.mxu0 0.0
        %632 = vmatprep.subr.mxu0 0.0
        %633 = vmatpush1.msra.mxu0 0.0
        %634 = vmatprep.subr.mxu0 0.0
        %635 = vmatpush1.msra.mxu0 0.0
        %636 = vmatprep.subr.mxu0 0.0
        %637 = vmatpush1.msra.mxu0 0.0
        %638 = vmatprep.subr.mxu0 0.0
        %639 = vmatpush1.msra.mxu0 0.0
        %640 = vmatprep.subr.mxu0 0.0
        %641 = vmatpush1.msra.mxu0 0.0
        %642 = vmatprep.subr.mxu0 0.0
        %643 = vmatpush1.msra.mxu0 0.0
        %644 = vmatprep.subr.mxu0 0.0
        %645 = vmatpush1.msra.mxu0 0.0
        %646 = vmatprep.subr.mxu0 0.0
        %647 = vmatpush1.msra.mxu0 0.0
        %648 = vmatprep.subr.mxu0 0.0
        %649 = vmatpush1.msra.mxu0 0.0
        %650 = vmatprep.subr.mxu0 0.0
        %651 = vmatpush1.msra.mxu0 0.0
        %652 = vmatprep.subr.mxu0 0.0
        %653 = vmatpush1.msra.mxu0 0.0
        %654 = vmatprep.subr.mxu0 0.0
        %655 = vmatpush1.msra.mxu0 0.0
        %656 = vmatprep.subr.mxu0 0.0
        %657 = vmatpush1.msra.mxu0 0.0
        %658 = vmatprep.subr.mxu0 0.0
        %659 = vmatpush1.msra.mxu0 0.0
        %660 = vmatprep.subr.mxu0 0.0
        %661 = vmatpush1.msra.mxu0 0.0
        %662 = vmatprep.subr.mxu0 0.0
        %663 = vmatpush1.msra.mxu0 0.0
        %664 = vmatprep.subr.mxu0 0.0
        %665 = vmatpush1.msra.mxu0 0.0
        %666 = vmatprep.subr.mxu0 0.0
        %667 = vmatpush1.msra.mxu0 0.0
        %668 = vmatprep.subr.mxu0 0.0
        %669 = vmatpush1.msra.mxu0 0.0
        %670 = vmatprep.subr.mxu0 0.0
        %671 = vmatpush1.msra.mxu0 0.0
        %672 = vmatprep.subr.mxu0 0.0
        %673 = vmatpush1.msra.mxu0 0.0
        %674 = vmatprep.subr.mxu0 0.0
        %675 = vmatpush1.msra.mxu0 0.0
        %676 = vmatprep.subr.mxu0 0.0
        %677 = vmatpush1.msra.mxu0 0.0
        %678 = vmatprep.subr.mxu0 0.0
        %679 = vmatpush1.msra.mxu0 0.0
        %680 = vmatprep.subr.mxu0 0.0
        %681 = vmatpush1.msra.mxu0 0.0
        %682 = vmatprep.subr.mxu0 0.0
        %683 = vmatpush1.msra.mxu0 0.0
        %684 = vmatprep.subr.mxu0 0.0
        %685 = vmatpush1.msra.mxu0 0.0
        %686 = vmatprep.subr.mxu0 0.0
        %687 = vmatpush1.msra.mxu0 0.0
        %688 = vmatprep.subr.mxu0 0.0
        %689 = vmatpush1.msra.mxu0 0.0
        %690 = vmatprep.subr.mxu0 0.0
        %691 = vmatpush1.msra.mxu0 0.0
        %692 = vmatprep.mubr.f32.mxu0 0.0
        %693 = vmatmul.mubr.f32.gmra.mrb[0].mxu0 %v626
        %v694 = vpop.f32.mrb[0].mxu0
        %v695 = vadd.f32 %v619, %v694
        %v696 = vpop.f32.mrb[0].mxu0
        %697 = vdwg.mxu0
        %v698 = vxor.u32 %v695, 2147483648
        %v699 = vmul.f32 %v698, 1.442695
        %v700 = vpow.pop %v699
        %v701 = vadd.f32 %v700, 1.0
        %v702 = vrcp.pop %v701
        %v703 = vmul.f32 1.0, %v702
        %v704 = vld [vmem:[#allocation2] sm:$0xff]
        %v705 = vld [vmem:[#allocation2 + $0x8] sm:$0xff]
        %v706 = vld [vmem:[#allocation2 + $0x10] sm:$0xff]
        %v707 = vld [vmem:[#allocation2 + $0x18] sm:$0xff]
        %v708 = vld [vmem:[#allocation2 + $0x20] sm:$0xff]
        %v709 = vld [vmem:[#allocation2 + $0x28] sm:$0xff]
        %v710 = vld [vmem:[#allocation2 + $0x30] sm:$0xff]
        %v711 = vld [vmem:[#allocation2 + $0x38] sm:$0xff]
        %vm712 = vcmask 130048
        %v714 = vsel %vm712, %v613, 0
        %716 = vmatprep.subr.mxu0 %v705
        %717 = vmatpush1.msra.mxu0 %v704
        %718 = vmatprep.subr.mxu0 %v707
        %719 = vmatpush1.msra.mxu0 %v706
        %720 = vmatprep.subr.mxu0 0.0
        %721 = vmatpush1.msra.mxu0 0.0
        %722 = vmatprep.subr.mxu0 0.0
        %723 = vmatpush1.msra.mxu0 0.0
        %724 = vmatprep.subr.mxu0 0.0
        %725 = vmatpush1.msra.mxu0 0.0
        %726 = vmatprep.subr.mxu0 0.0
        %727 = vmatpush1.msra.mxu0 0.0
        %728 = vmatprep.subr.mxu0 0.0
        %729 = vmatpush1.msra.mxu0 0.0
        %730 = vmatprep.subr.mxu0 0.0
        %731 = vmatpush1.msra.mxu0 0.0
        %732 = vmatprep.subr.mxu0 0.0
        %733 = vmatpush1.msra.mxu0 0.0
        %734 = vmatprep.subr.mxu0 0.0
        %735 = vmatpush1.msra.mxu0 0.0
        %736 = vmatprep.subr.mxu0 0.0
        %737 = vmatpush1.msra.mxu0 0.0
        %738 = vmatprep.subr.mxu0 0.0
        %739 = vmatpush1.msra.mxu0 0.0
        %740 = vmatprep.subr.mxu0 0.0
        %741 = vmatpush1.msra.mxu0 0.0
        %742 = vmatprep.subr.mxu0 0.0
        %743 = vmatpush1.msra.mxu0 0.0
        %744 = vmatprep.subr.mxu0 0.0
        %745 = vmatpush1.msra.mxu0 0.0
        %746 = vmatprep.subr.mxu0 0.0
        %747 = vmatpush1.msra.mxu0 0.0
        %748 = vmatprep.subr.mxu0 0.0
        %749 = vmatpush1.msra.mxu0 0.0
        %750 = vmatprep.subr.mxu0 0.0
        %751 = vmatpush1.msra.mxu0 0.0
        %752 = vmatprep.subr.mxu0 0.0
        %753 = vmatpush1.msra.mxu0 0.0
        %754 = vmatprep.subr.mxu0 0.0
        %755 = vmatpush1.msra.mxu0 0.0
        %756 = vmatprep.subr.mxu0 0.0
        %757 = vmatpush1.msra.mxu0 0.0
        %758 = vmatprep.subr.mxu0 0.0
        %759 = vmatpush1.msra.mxu0 0.0
        %760 = vmatprep.subr.mxu0 0.0
        %761 = vmatpush1.msra.mxu0 0.0
        %762 = vmatprep.subr.mxu0 0.0
        %763 = vmatpush1.msra.mxu0 0.0
        %764 = vmatprep.subr.mxu0 0.0
        %765 = vmatpush1.msra.mxu0 0.0
        %766 = vmatprep.subr.mxu0 0.0
        %767 = vmatpush1.msra.mxu0 0.0
        %768 = vmatprep.subr.mxu0 0.0
        %769 = vmatpush1.msra.mxu0 0.0
        %770 = vmatprep.subr.mxu0 0.0
        %771 = vmatpush1.msra.mxu0 0.0
        %772 = vmatprep.subr.mxu0 0.0
        %773 = vmatpush1.msra.mxu0 0.0
        %774 = vmatprep.subr.mxu0 0.0
        %775 = vmatpush1.msra.mxu0 0.0
        %776 = vmatprep.subr.mxu0 0.0
        %777 = vmatpush1.msra.mxu0 0.0
        %778 = vmatprep.subr.mxu0 0.0
        %779 = vmatpush1.msra.mxu0 0.0
        %780 = vmatprep.mubr.f32.mxu0 0.0
        %781 = vmatmul.mubr.f32.gmra.mrb[0].mxu0 %v714
        %v782 = vpop.f32.mrb[0].mxu0
        %v783 = vadd.f32 0.0, %v782
        %v784 = vpop.f32.mrb[0].mxu0
        %v785 = vadd.f32 0.0, %v784
        %786 = vdwg.mxu0
        %v788 = vsel %vm712, %v703, 0
        %790 = vmatprep.subr.mxu0 %v709
        %791 = vmatpush1.msra.mxu0 %v708
        %792 = vmatprep.subr.mxu0 %v711
        %793 = vmatpush1.msra.mxu0 %v710
        %794 = vmatprep.subr.mxu0 0.0
        %795 = vmatpush1.msra.mxu0 0.0
        %796 = vmatprep.subr.mxu0 0.0
        %797 = vmatpush1.msra.mxu0 0.0
        %798 = vmatprep.subr.mxu0 0.0
        %799 = vmatpush1.msra.mxu0 0.0
        %800 = vmatprep.subr.mxu0 0.0
        %801 = vmatpush1.msra.mxu0 0.0
        %802 = vmatprep.subr.mxu0 0.0
        %803 = vmatpush1.msra.mxu0 0.0
        %804 = vmatprep.subr.mxu0 0.0
        %805 = vmatpush1.msra.mxu0 0.0
        %806 = vmatprep.subr.mxu0 0.0
        %807 = vmatpush1.msra.mxu0 0.0
        %808 = vmatprep.subr.mxu0 0.0
        %809 = vmatpush1.msra.mxu0 0.0
        %810 = vmatprep.subr.mxu0 0.0
        %811 = vmatpush1.msra.mxu0 0.0
        %812 = vmatprep.subr.mxu0 0.0
        %813 = vmatpush1.msra.mxu0 0.0
        %814 = vmatprep.subr.mxu0 0.0
        %815 = vmatpush1.msra.mxu0 0.0
        %816 = vmatprep.subr.mxu0 0.0
        %817 = vmatpush1.msra.mxu0 0.0
        %818 = vmatprep.subr.mxu0 0.0
        %819 = vmatpush1.msra.mxu0 0.0
        %820 = vmatprep.subr.mxu0 0.0
        %821 = vmatpush1.msra.mxu0 0.0
        %822 = vmatprep.subr.mxu0 0.0
        %823 = vmatpush1.msra.mxu0 0.0
        %824 = vmatprep.subr.mxu0 0.0
        %825 = vmatpush1.msra.mxu0 0.0
        %826 = vmatprep.subr.mxu0 0.0
        %827 = vmatpush1.msra.mxu0 0.0
        %828 = vmatprep.subr.mxu0 0.0
        %829 = vmatpush1.msra.mxu0 0.0
        %830 = vmatprep.subr.mxu0 0.0
        %831 = vmatpush1.msra.mxu0 0.0
        %832 = vmatprep.subr.mxu0 0.0
        %833 = vmatpush1.msra.mxu0 0.0
        %834 = vmatprep.subr.mxu0 0.0
        %835 = vmatpush1.msra.mxu0 0.0
        %836 = vmatprep.subr.mxu0 0.0
        %837 = vmatpush1.msra.mxu0 0.0
        %838 = vmatprep.subr.mxu0 0.0
        %839 = vmatpush1.msra.mxu0 0.0
        %840 = vmatprep.subr.mxu0 0.0
        %841 = vmatpush1.msra.mxu0 0.0
        %842 = vmatprep.subr.mxu0 0.0
        %843 = vmatpush1.msra.mxu0 0.0
        %844 = vmatprep.subr.mxu0 0.0
        %845 = vmatpush1.msra.mxu0 0.0
        %846 = vmatprep.subr.mxu0 0.0
        %847 = vmatpush1.msra.mxu0 0.0
        %848 = vmatprep.subr.mxu0 0.0
        %849 = vmatpush1.msra.mxu0 0.0
        %850 = vmatprep.subr.mxu0 0.0
        %851 = vmatpush1.msra.mxu0 0.0
        %852 = vmatprep.subr.mxu0 0.0
        %853 = vmatpush1.msra.mxu0 0.0
        %854 = vmatprep.mubr.f32.mxu0 0.0
        %855 = vmatmul.mubr.f32.gmra.mrb[0].mxu0 %v788
        %v856 = vpop.f32.mrb[0].mxu0
        %v857 = vadd.f32 0.0, %v856
        %v858 = vpop.f32.mrb[0].mxu0
        %v859 = vadd.f32 0.0, %v858
        %860 = vdwg.mxu0
        %v861 = vmul.f32 %v783, %v857
        %v862 = vmul.f32 %v785, %v859
        %v865 = vcombine.low %v861, %v862
        %v867 = vmul.f32 %v346, %v865
        %868 = vst [vmem:[%s340] sm:$0xff] %v867
        %s869 = sand.u32 %s226, 1
        %s870 = scalar_lea.sflag [#allocation4], %s869
        %s871 = sand.u32 %s226, 1
        %s872 = smul.addr %s871, 8
        %s873 = scalar_lea.vmem [#allocation5], %s872
        // Predicated region
        $region61: #{tpu_custom_call.1} parent=55 // pred_check
          %p874 = pneg %p236
        $region62: #{tpu_custom_call.1} parent=55 // pred_check_branch
          %876 = sbr.rel (%p874) target = $region64
        $region63: #{tpu_custom_call.1} parent=55 // pred_region
          %s878 = ssub.s32 128, 128
          %879 = vsyncadd %s870, %s878
          %s880 = smul.addr %s24, 2
          %s881 = smul.addr %s880, 64
          %s882 = scalar_lea.hbm %s9, %s881
          %s884 = sshll.u32 %s873, 4
          %s885 = int_to_ptr.vmem [resolvable:$true] %s884
          %887 = dma.vmem_to_hbm [thread:$0]  %s885, 128, %s882, %s870
        $region64: #{tpu_custom_call.1} parent=55 // pred_fallthru
          _
      $region56: #{tpu_custom_call.1} parent=5 // pred_fallthru
        _
      %p888 = scmp.le.s32.totalorder 2, %s19
      // Predicated region
      $region65: #{tpu_custom_call.1} parent=5 // pred_check
        %p889 = pneg %p888
      $region66: #{tpu_custom_call.1} parent=5 // pred_check_branch
        %891 = sbr.rel (%p889) target = $region68
      $region67: #{tpu_custom_call.1} parent=5 // pred_region
        %s892 = ssub.s32 %s19, 2
        // Predicated region
        $region69: #{tpu_custom_call.1} parent=67 // pred_check
          %p893 = pneg %p242
        $region70: #{tpu_custom_call.1} parent=67 // pred_check_branch
          %895 = sbr.rel (%p893) target = $region72
        $region71: #{tpu_custom_call.1} parent=67 // pred_region
          %s896 = sand.u32 %s227, 1
          %s897 = scalar_lea.sflag [#allocation4], %s896
          %s898 = sand.u32 %s227, 1
          %s899 = smul.addr %s898, 8
          %s900 = scalar_lea.vmem [#allocation5], %s899
          %901 = dma.done %s897, 128
        $region72: #{tpu_custom_call.1} parent=67 // pred_fallthru
          _
      $region68: #{tpu_custom_call.1} parent=5 // pred_fallthru
        _
    $region6: #{tpu_custom_call.1} parent=1 // loop_footer
      %s23 = sadd.s32 1, %s19
    $region7: #{tpu_custom_call.1} parent=1 // loop_footer_branch
      %18 = sbr.rel target = $region3
    $region8: #{tpu_custom_call.1} parent=1 // loop_exit
      _
    %902 = vsyncpa [#allocation3], 1
    %s903 = scalar_lea.sflag [#allocation3], 1
    %904 = vsyncpa %s903, 1
    %905 = vsyncpa [#allocation4], 1
    %s906 = scalar_lea.sflag [#allocation4], 1
    %907 = vsyncpa %s906, 1

</llo_original>
